<compile_context>
chip_gen: v7x
topology: tpu7x:2x2x1
jax: 0.10.0
libtpu: 0.0.40
codegen_flags: <defaults>
</compile_context>

<pallas_src>
import jax
import jax.numpy as jnp
from jax import lax
from jax.experimental import pallas as pl
from jax.experimental.pallas import tpu as pltpu


# ---------------------------------------------------------------------------
# helpers
# ---------------------------------------------------------------------------

def _round_up(a, b):
    return (a + b - 1) // b * b


def _default_token_tile():
    # MXU is 128-wide on v5e, 256-wide on v6e/v7x; a big token tile also keeps
    # the grid-step count (and its ~0.35us fixed overhead) low.
    try:
        kind = jax.devices()[0].device_kind.lower()
    except Exception:
        return 256
    return 128 if "v5" in kind else 256


# ---------------------------------------------------------------------------
# kernel 1: one-hot matmul path (small vocabularies)
# ---------------------------------------------------------------------------

def _onehot_embed_kernel(ids_ref, table_ref, out_ref):
    # ids_ref:   (TT, 1)  int32  — token ids for this token tile
    # table_ref: (V, TD)         — one D-tile of the (lane-padded) table
    # out_ref:   (TT, TD)        — gathered embeddings for this (token, D) tile
    ids = ids_ref[...]
    tt = ids.shape[0]
    v = table_ref.shape[0]
    col = lax.broadcasted_iota(jnp.int32, (tt, v), 1)          # (TT, V)
    onehot = (col == ids).astype(table_ref.dtype)              # (TT, V)
    out_ref[...] = jnp.dot(
        onehot, table_ref[...], preferred_element_type=jnp.float32
    ).astype(out_ref.dtype)


def _embed_onehot(ids, table, token_tile):
    (n,) = ids.shape
    v, d = table.shape

    # Lane-dense, 128-aligned D tiling so stores are unmasked `vst` and only
    # a bounded (V, TD) table block has to live in VMEM (double-buffered).
    d_pad = _round_up(d, 128)
    if d_pad <= 512:
        td = d_pad
    elif d_pad % 512 == 0:
        td = 512
    elif d_pad % 256 == 0:
        td = 256
    else:
        td = 128

    tt = min(token_tile, _round_up(n, 8))
    n_pad = _round_up(n, tt)

    ids2d = jnp.zeros((n_pad, 1), jnp.int32).at[:n, 0].set(ids)
    table_p = table if d_pad == d else jnp.pad(table, ((0, 0), (0, d_pad - d)))

    out = pl.pallas_call(
        _onehot_embed_kernel,
        out_shape=jax.ShapeDtypeStruct((n_pad, d_pad), table.dtype),
        grid_spec=pltpu.PrefetchScalarGridSpec(
            num_scalar_prefetch=0,
            grid=(n_pad // tt, d_pad // td),
            in_specs=[
                pl.BlockSpec((tt, 1), lambda i, j: (i, 0)),
                # Note: with V <= 1024 and TD <= 512 this block is <= 2 MiB
                # (<= 4 MiB double-buffered), comfortably under the default
                # scoped-VMEM budget on every generation incl. v7x.
                pl.BlockSpec((v, td), lambda i, j: (0, j)),
            ],
            out_specs=pl.BlockSpec((tt, td), lambda i, j: (i, j)),
        ),
        compiler_params=pltpu.CompilerParams(
            dimension_semantics=("parallel", "parallel")),
    )(ids2d, table_p)

    return out[:n, :d]


# ---------------------------------------------------------------------------
# kernel 2: HBM row-gather path (realistic vocabularies)
# ---------------------------------------------------------------------------

def _gather_embed_kernel(ids_smem, table_hbm, out_ref, sem):
    # ids_smem:  (N_pad,) int32 in SMEM (scalar prefetch)
    # table_hbm: (V, D) ref left in HBM (memory_space=pl.ANY)
    # out_ref:   (TT, D) VMEM output block for this token tile
    # sem:       single DMA-completion semaphore shared by all row copies
    tt = out_ref.shape[0]
    base = pl.program_id(0) * tt

    def issue(t, carry):
        tok = ids_smem[base + t]
        pltpu.make_async_copy(
            table_hbm.at[pl.ds(tok, 1), :],
            out_ref.at[pl.ds(t, 1), :],
            sem,
        ).start()
        return carry

    lax.fori_loop(0, tt, issue, 0)

    def drain(t, carry):
        # .wait() only needs the per-copy byte count + the semaphore; TT
        # waits on the shared semaphore retire all TT row copies.
        pltpu.make_async_copy(
            table_hbm.at[pl.ds(0, 1), :],
            out_ref.at[pl.ds(0, 1), :],
            sem,
        ).wait()
        return carry

    lax.fori_loop(0, tt, drain, 0)


def _embed_gather(ids, table, token_tile, vmem_budget_bytes=8 * 1024 * 1024):
    (n,) = ids.shape
    v, d = table.shape
    row_bytes = d * table.dtype.itemsize

    # Output block is double-buffered by the pipeline -> 2 * tt * row_bytes.
    # Budget well under the smallest default scoped VMEM (v5e: 16 MiB).
    tt_cap = max(8, vmem_budget_bytes // (2 * row_bytes))
    tt = min(token_tile, tt_cap, _round_up(n, 8))
    tt = max(8, (tt // 8) * 8)
    n_pad = _round_up(n, tt)

    # NOTE: ids live whole in SMEM (scalar prefetch); fine up to ~100k tokens.
    ids_pad = jnp.zeros((n_pad,), jnp.int32).at[:n].set(ids)

    out = pl.pallas_call(
        _gather_embed_kernel,
        out_shape=jax.ShapeDtypeStruct((n_pad, d), table.dtype),
        grid_spec=pltpu.PrefetchScalarGridSpec(
            num_scalar_prefetch=1,
            grid=(n_pad // tt,),
            in_specs=[pl.BlockSpec(memory_space=pl.ANY)],   # table stays in HBM
            out_specs=pl.BlockSpec((tt, d), lambda i, ids_ref: (i, 0)),
            scratch_shapes=[pltpu.SemaphoreType.DMA(())],
        ),
        compiler_params=pltpu.CompilerParams(
            dimension_semantics=("parallel",)),
    )(ids_pad, table)

    return out[:n]


# ---------------------------------------------------------------------------
# public wrapper (matches Embeddings.forward)
# ---------------------------------------------------------------------------

def embeddings_forward(x, table, *, impl=None, token_tile=None):
    """x: (B, S) integer token ids; table: (V, D). Returns (B, S, D)."""
    B, S = x.shape
    V, D = table.shape
    N = B * S
    if token_tile is None:
        token_tile = _default_token_tile()

    # TODO(synk): PyTorch nn.Embedding raises IndexError on out-of-range ids;
    # we clamp instead so a bad id can never issue an out-of-bounds DMA.
    ids = jnp.clip(x.reshape(N).astype(jnp.int32), 0, V - 1)

    if impl is None:
        # One-hot matmul only wins while V is under the 2*V*D-FLOPs vs
        # D-bytes crossover (~0.5k-1.3k rows depending on generation) and the
        # table block is trivially VMEM-resident; otherwise do a true gather.
        impl = "onehot" if V <= 1024 else "gather"

    if impl == "onehot":
        out_flat = _embed_onehot(ids, table, token_tile)
    elif impl == "gather":
        out_flat = _embed_gather(ids, table, token_tile)
    else:
        raise ValueError(f"unknown impl: {impl}")

    return out_flat.reshape(B, S, D)


def init_embedding_table(key, vocab_size, dm, pad_id, dtype=jnp.float32):
    # Matches nn.Embedding init semantics relevant to forward: the pad_id row
    # is zeroed (PyTorch zeroes weight[padding_idx] in reset_parameters).
    w = jax.random.normal(key, (vocab_size, dm), dtype=dtype)
    w = w.at[pad_id].set(0.0)
    return w


if __name__ == "__main__":
    key = jax.random.PRNGKey(0)
    k_w, k_x, k_w2, k_x2 = jax.random.split(key, 4)

    # --- case 1: small vocab -> one-hot / MXU path (vocab=64, dm=32) -------
    vocab_size, dm, pad_id = 64, 32, 0
    B, S = 2, 8
    table = init_embedding_table(k_w, vocab_size, dm, pad_id)
    x = jax.random.randint(k_x, (B, S), 0, vocab_size, dtype=jnp.int32)
    x = x.at[0, 0].set(pad_id)     # make sure a padding token appears

    out = jax.block_until_ready(embeddings_forward(x, table))
    ref = jnp.take(table, x, axis=0)
    assert out.shape == (B, S, dm)
    assert jnp.allclose(out, ref, atol=1e-5, rtol=1e-5)
    assert jnp.all(out[0, 0] == 0.0)

    # --- case 2: larger vocab -> HBM row-gather (DMA) path ------------------
    vocab_size2, dm2 = 2048, 128
    table2 = init_embedding_table(k_w2, vocab_size2, dm2, pad_id)
    x2 = jax.random.randint(k_x2, (B, S), 0, vocab_size2, dtype=jnp.int32)
    x2 = x2.at[1, 3].set(pad_id)

    out2 = jax.block_until_ready(embeddings_forward(x2, table2))
    ref2 = jnp.take(table2, x2, axis=0)
    assert out2.shape == (B, S, dm2)
    assert jnp.allclose(out2, ref2, atol=1e-5, rtol=1e-5)
    assert jnp.all(out2[1, 3] == 0.0)

    print("KERNEL_OK")
</pallas_src>

<mosaic_0001>
module attributes {stable_mosaic.version = 11 : i64} {
  func.func @_onehot_embed_kernel(%arg0: i32, %arg1: i32, %arg2: memref<16x1xi32, #tpu.memory_space<vmem>>, %arg3: memref<64x128xf32, #tpu.memory_space<vmem>>, %arg4: memref<16x128xf32, #tpu.memory_space<vmem>>) attributes {dimension_semantics = [#tpu.dimension_semantics<parallel>, #tpu.dimension_semantics<parallel>], iteration_bounds = array<i64: 1, 1>, scalar_prefetch = 0 : i64, scratch_operands = 0 : i64, tpu.core_type = #tpu.core_type<tc>, window_params = [{transform_indices = @transform_0, window_bounds = array<i64: 16, 1>}, {transform_indices = @transform_1, window_bounds = array<i64: 64, 128>}, {transform_indices = @transform_2, window_bounds = array<i64: 16, 128>}]} {
    %c0 = arith.constant 0 : index
    %c0_0 = arith.constant 0 : index
    %0 = vector.load %arg2[%c0, %c0_0] : memref<16x1xi32, #tpu.memory_space<vmem>>, vector<16x1xi32>
    %1 = tpu.iota {dimensions = array<i32: 1>} : vector<16x64xi32>
    %2 = vector.broadcast %0 : vector<16x1xi32> to vector<16x64xi32>
    %3 = arith.cmpi eq, %1, %2 : vector<16x64xi32>
    %4 = arith.extui %3 : vector<16x64xi1> to vector<16x64xi32>
    %5 = arith.sitofp %4 : vector<16x64xi32> to vector<16x64xf32>
    %c0_1 = arith.constant 0 : index
    %c0_2 = arith.constant 0 : index
    %6 = vector.load %arg3[%c0_1, %c0_2] : memref<64x128xf32, #tpu.memory_space<vmem>>, vector<64x128xf32>
    %cst = arith.constant dense<0.000000e+00> : vector<16x128xf32>
    %7 = tpu.matmul %5, %6, %cst {dimension_numbers = #tpu.dot_dimension_numbers<[1], [0], [0], [1], [0, 0, 1, 1], [], []>} : vector<16x64xf32>, vector<64x128xf32>, vector<16x128xf32> -> vector<16x128xf32>
    %c0_3 = arith.constant 0 : index
    %c0_4 = arith.constant 0 : index
    %8 = vector.load %arg4[%c0_3, %c0_4] : memref<16x128xf32, #tpu.memory_space<vmem>>, vector<16x128xf32>
    tpu.vector_store %arg4[%c0_3, %c0_4], %7 {strides = array<i32>} : memref<16x128xf32, #tpu.memory_space<vmem>>, vector<16x128xf32>,
    return
  }
  func.func @transform_0(%arg0: i32, %arg1: i32) -> (i32, i32) {
    %c0_i32 = arith.constant 0 : i32
    %c0_i32_0 = arith.constant 0 : i32
    return %arg0, %c0_i32 : i32, i32
  }
  func.func @transform_1(%arg0: i32, %arg1: i32) -> (i32, i32) {
    %c0_i32 = arith.constant 0 : i32
    %c0_i32_0 = arith.constant 0 : i32
    return %c0_i32, %arg1 : i32, i32
  }
  func.func @transform_2(%arg0: i32, %arg1: i32) -> (i32, i32) {
    %c0_i32 = arith.constant 0 : i32
    return %arg0, %arg1 : i32, i32
  }
}

</mosaic_0001>

<llo_original>
// kernel: tpu_custom_call.1
$region0: #{tpu_custom_call.1}
  #allocation0 [shape = 'u32[]', space=smem, size = 0x4, offset = 0x4, fixed_abs, tag = 'smem constant byte address 0x4 - core index']
  #allocation1 [shape = 'u32[144,128]{1,0:T(1,128)}', space=vmem, size = 0x12000, scoped, tag = 'internal scratch']
  %s0 = inlined_call_operand.vmem [shape: s32[16,1], index: 0, kind: input, shape index: {}]
  %s1 = inlined_call_operand.hbm [shape: f32[64,128], index: 1, kind: input, shape index: {}]
  %s2 = inlined_call_operand.hbm [shape: f32[16,128], index: 2, kind: output, shape index: {}]
  %s3 = sld [smem:[#allocation0]]
  $region22: #{tpu_custom_call.1} parent=0
    _
  %s5 = ssub.s32 1, %s3
  %s6 = scalar_select 0, %s5, %s3
  $region1: #{tpu_custom_call.1} parent=0
    #allocation2 [shape = 'u8[32768]{0}', space=vmem, size = 0x8000, scoped, tag = 'input window, operand 1, single buffered']
    #allocation3 [shape = 's32[1]{0}', space=sflag, size = 0x4, scoped, tag = 'scoped memory for tpu_custom_call.1']
    #allocation4 [shape = 's32[1]{0}', space=sflag, size = 0x4, scoped, tag = 'scoped memory for tpu_custom_call.1']
    #allocation5 [shape = 'u8[8192]{0}', space=vmem, size = 0x2000, scoped, tag = 'output window, operand 0, single buffered']
    %7 = vsyncpa [#allocation3], 0
    %8 = vsyncpa [#allocation4], 0
    // Predicated region
    $region2: #{tpu_custom_call.1} parent=1 // pred_check
      _
    $region3: #{tpu_custom_call.1} parent=1 // pred_check_branch
      %10 = sbr.rel (0) target = $region5
    $region4: #{tpu_custom_call.1} parent=1 // pred_region
      _
    $region5: #{tpu_custom_call.1} parent=1 // pred_fallthru
      _
    // Predicated region
    $region6: #{tpu_custom_call.1} parent=1 // pred_check
      _
    $region7: #{tpu_custom_call.1} parent=1 // pred_check_branch
      %12 = sbr.rel (0) target = $region9
    $region8: #{tpu_custom_call.1} parent=1 // pred_region
      %s14 = ssub.s32 1024, 1024
      %15 = vsyncadd [#allocation3], %s14
      %s16 = sshll.u32 [#allocation2], 4
      %s17 = int_to_ptr.vmem [resolvable:$true] %s16
      %22 = dma.hbm_to_vmem [thread:$0]  %s1, 1024, %s17, [#allocation3], 128, 128, 8
    $region9: #{tpu_custom_call.1} parent=1 // pred_fallthru
      _
    // Predicated region
    $region10: #{tpu_custom_call.1} parent=1 // pred_check
      _
    $region11: #{tpu_custom_call.1} parent=1 // pred_check_branch
      %24 = sbr.rel (0) target = $region13
    $region12: #{tpu_custom_call.1} parent=1 // pred_region
      %25 = dma.done [#allocation3], 1024
    $region13: #{tpu_custom_call.1} parent=1 // pred_fallthru
      _
    %v26 = vld [vmem:[%s0] sm:$0xff]
    %v27 = vld [vmem:[%s0 + $0x8] sm:$0xff]
    %v28 = vlaneseq
    %v29 = vand.u32 %v28, 127
    %30 = vset.pattern.permute.xlu0 0
    %31 = vperm.xlu0 %30, %v26
    %v32 = vpop.permute.xlu0 %31
    %33 = vset.pattern.permute.xlu0 0
    %34 = vperm.xlu0 %33, %v27
    %v35 = vpop.permute.xlu0 %34
    %vm36 = vcmp.eq.s32.totalorder %v29, %v32
    %vm37 = vcmp.eq.s32.totalorder %v29, %v35
    %v38 = vsel %vm36, 1, 0
    %v39 = vsel %vm37, 1, 0
    %v40 = vcvt.s32.f32 %v38
    %v41 = vcvt.s32.f32 %v39
    %v42 = vld [vmem:[#allocation2] sm:$0xff]
    %v43 = vld [vmem:[#allocation2 + $0x8] sm:$0xff]
    %v44 = vld [vmem:[#allocation2 + $0x10] sm:$0xff]
    %v45 = vld [vmem:[#allocation2 + $0x18] sm:$0xff]
    %v46 = vld [vmem:[#allocation2 + $0x20] sm:$0xff]
    %v47 = vld [vmem:[#allocation2 + $0x28] sm:$0xff]
    %v48 = vld [vmem:[#allocation2 + $0x30] sm:$0xff]
    %v49 = vld [vmem:[#allocation2 + $0x38] sm:$0xff]
    %vm50 = vcmask 523264
    %v52 = vsel %vm50, %v40, 0
    %v55 = vsel %vm50, %v41, 0
    %57 = vmatprep.subr.mxu0 0.0
    %58 = vmatpush1.msra.mxu0 %v42
    %59 = vmatprep.subr.mxu0 0.0
    %60 = vmatpush1.msra.mxu0 %v43
    %61 = vmatprep.subr.mxu0 0.0
    %62 = vmatpush1.msra.mxu0 %v44
    %63 = vmatprep.subr.mxu0 0.0
    %64 = vmatpush1.msra.mxu0 %v45
    %65 = vmatprep.subr.mxu0 0.0
    %66 = vmatpush1.msra.mxu0 %v46
    %67 = vmatprep.subr.mxu0 0.0
    %68 = vmatpush1.msra.mxu0 %v47
    %69 = vmatprep.subr.mxu0 0.0
    %70 = vmatpush1.msra.mxu0 %v48
    %71 = vmatprep.subr.mxu0 0.0
    %72 = vmatpush1.msra.mxu0 %v49
    %73 = vmatprep.subr.mxu0 0.0
    %74 = vmatpush1.msra.mxu0 0.0
    %75 = vmatprep.subr.mxu0 0.0
    %76 = vmatpush1.msra.mxu0 0.0
    %77 = vmatprep.subr.mxu0 0.0
    %78 = vmatpush1.msra.mxu0 0.0
    %79 = vmatprep.subr.mxu0 0.0
    %80 = vmatpush1.msra.mxu0 0.0
    %81 = vmatprep.subr.mxu0 0.0
    %82 = vmatpush1.msra.mxu0 0.0
    %83 = vmatprep.subr.mxu0 0.0
    %84 = vmatpush1.msra.mxu0 0.0
    %85 = vmatprep.subr.mxu0 0.0
    %86 = vmatpush1.msra.mxu0 0.0
    %87 = vmatprep.subr.mxu0 0.0
    %88 = vmatpush1.msra.mxu0 0.0
    %89 = vmatprep.subr.mxu0 0.0
    %90 = vmatpush1.msra.mxu0 0.0
    %91 = vmatprep.subr.mxu0 0.0
    %92 = vmatpush1.msra.mxu0 0.0
    %93 = vmatprep.subr.mxu0 0.0
    %94 = vmatpush1.msra.mxu0 0.0
    %95 = vmatprep.subr.mxu0 0.0
    %96 = vmatpush1.msra.mxu0 0.0
    %97 = vmatprep.subr.mxu0 0.0
    %98 = vmatpush1.msra.mxu0 0.0
    %99 = vmatprep.subr.mxu0 0.0
    %100 = vmatpush1.msra.mxu0 0.0
    %101 = vmatprep.subr.mxu0 0.0
    %102 = vmatpush1.msra.mxu0 0.0
    %103 = vmatprep.subr.mxu0 0.0
    %104 = vmatpush1.msra.mxu0 0.0
    %105 = vmatprep.subr.mxu0 0.0
    %106 = vmatpush1.msra.mxu0 0.0
    %107 = vmatprep.subr.mxu0 0.0
    %108 = vmatpush1.msra.mxu0 0.0
    %109 = vmatprep.subr.mxu0 0.0
    %110 = vmatpush1.msra.mxu0 0.0
    %111 = vmatprep.subr.mxu0 0.0
    %112 = vmatpush1.msra.mxu0 0.0
    %113 = vmatprep.subr.mxu0 0.0
    %114 = vmatpush1.msra.mxu0 0.0
    %115 = vmatprep.subr.mxu0 0.0
    %116 = vmatpush1.msra.mxu0 0.0
    %117 = vmatprep.subr.mxu0 0.0
    %118 = vmatpush1.msra.mxu0 0.0
    %119 = vmatprep.subr.mxu0 0.0
    %120 = vmatpush1.msra.mxu0 0.0
    %121 = vmatprep.mubr.f32.mxu0 0.0
    %122 = vmatmul.mubr.f32.gmra.mrb[0].mxu0 %v52
    %v123 = vpop.f32.mrb[0].mxu0
    %v124 = vadd.f32 0.0, %v123
    %v125 = vpop.f32.mrb[0].mxu0
    %126 = vmatprep.mubr.f32.mxu0 0.0
    %127 = vmatmul.mubr.f32.gmra.mrb[0].mxu0 %v55
    %v128 = vpop.f32.mrb[0].mxu0
    %v129 = vadd.f32 0.0, %v128
    %v130 = vpop.f32.mrb[0].mxu0
    %131 = vdwg.mxu0
    %132 = vst [vmem:[#allocation5] sm:$0xff] %v124
    %133 = vst [vmem:[#allocation5 + $0x8] sm:$0xff] %v129
    // Predicated region
    $region14: #{tpu_custom_call.1} parent=1 // pred_check
      _
    $region15: #{tpu_custom_call.1} parent=1 // pred_check_branch
      %135 = sbr.rel (0) target = $region17
    $region16: #{tpu_custom_call.1} parent=1 // pred_region
      %s137 = ssub.s32 256, 256
      %138 = vsyncadd [#allocation4], %s137
      %s139 = sshll.u32 [#allocation5], 4
      %s140 = int_to_ptr.vmem [resolvable:$true] %s139
      %145 = dma.vmem_to_hbm [thread:$0]  %s140, 256, %s2, [#allocation4], 128, 128, 8
    $region17: #{tpu_custom_call.1} parent=1 // pred_fallthru
      _
    // Predicated region
    $region18: #{tpu_custom_call.1} parent=1 // pred_check
      _
    $region19: #{tpu_custom_call.1} parent=1 // pred_check_branch
      %147 = sbr.rel (0) target = $region21
    $region20: #{tpu_custom_call.1} parent=1 // pred_region
      %148 = dma.done [#allocation4], 256
    $region21: #{tpu_custom_call.1} parent=1 // pred_fallthru
      _
    %149 = vsyncpa [#allocation3], 1
    %150 = vsyncpa [#allocation4], 1

</llo_original>
